<compile_context>
chip_gen: v7x
topology: tpu7x:2x2x1
jax: 0.10.0
libtpu: 0.0.40
codegen_flags: <defaults>
</compile_context>

<pallas_src>
import math
import functools

import numpy as np
import jax
import jax.numpy as jnp
from jax import lax
from jax.experimental import pallas as pl
from jax.experimental.pallas import tpu as pltpu


_NEG_INF = -1e30  # finite "masked" value: NaN-safe vs -inf under online softmax


def _round_up(x, m):
    return ((x + m - 1) // m) * m


# ----------------------------------------------------------------------------
# Kernel 1: fused Q/K/V projection (single wide matmul, Q pre-scaled)
# ----------------------------------------------------------------------------
def _qkv_proj_kernel(x_ref, w_ref, q_ref, k_ref, v_ref, *, scale, d_out_pad):
    x = x_ref[...]                                        # (block_t, d_in_pad), native dtype
    qkv = jnp.dot(x, w_ref[...], preferred_element_type=jnp.float32)  # (block_t, 3*d_out_pad)
    # Slices are 128-lane aligned (d_out_pad is a multiple of 128).
    q_ref[...] = (qkv[:, :d_out_pad] * scale).astype(q_ref.dtype)     # fold 1/sqrt(d_out) into Q
    k_ref[...] = qkv[:, d_out_pad:2 * d_out_pad].astype(k_ref.dtype)
    v_ref[...] = qkv[:, 2 * d_out_pad:].astype(v_ref.dtype)
    # TODO(synk): for production-size d_in/d_out the full weight block (double-
    # buffered) should be K-tiled or use pipeline_mode=pl.Buffered(1) to stay
    # inside v7x's 64 MiB VMEM; irrelevant at these shapes.


# ----------------------------------------------------------------------------
# Kernel 2: flash-style causal attention on a flattened triangular grid
# ----------------------------------------------------------------------------
def _flash_attn_kernel(qi_map_ref, kv_map_ref,           # scalar-prefetch (SMEM)
                       q_ref, k_ref, v_ref, o_ref,        # inputs / output (VMEM)
                       m_ref, l_ref, acc_ref,             # scratch (VMEM)
                       *, block_q, block_k):
    s_idx = pl.program_id(1)
    qi = qi_map_ref[s_idx]          # q-tile index for this step
    kv = kv_map_ref[s_idx]          # kv-tile index for this step (kv <= qi always)

    @pl.when(kv == 0)
    def _init():
        # Finite init (see _NEG_INF note): no -inf anywhere in the recurrence.
        m_ref[...] = jnp.full(m_ref.shape, _NEG_INF, dtype=jnp.float32)
        l_ref[...] = jnp.zeros(l_ref.shape, dtype=jnp.float32)
        acc_ref[...] = jnp.zeros(acc_ref.shape, dtype=jnp.float32)

    def update(apply_mask):
        # q @ k^T: contract last dims of both operands (no explicit transpose).
        s = lax.dot_general(q_ref[...], k_ref[...],
                            dimension_numbers=(((1,), (1,)), ((), ())),
                            preferred_element_type=jnp.float32)       # (bq, bk) f32
        if apply_mask:  # traced only for diagonal tiles
            row = qi * block_q + lax.broadcasted_iota(jnp.int32, (block_q, block_k), 0)
            col = kv * block_k + lax.broadcasted_iota(jnp.int32, (block_q, block_k), 1)
            s = jnp.where(col > row, _NEG_INF, s)
        m_prev = m_ref[...]                                           # (bq, 1)
        m_new = jnp.maximum(m_prev, jnp.max(s, axis=-1, keepdims=True))
        alpha = jnp.exp(m_prev - m_new)
        p = jnp.exp(s - m_new)                                        # unnormalized probs
        l_ref[...] = alpha * l_ref[...] + jnp.sum(p, axis=-1, keepdims=True)
        acc_ref[...] = alpha * acc_ref[...] + jnp.dot(
            p.astype(v_ref.dtype), v_ref[...], preferred_element_type=jnp.float32)
        m_ref[...] = m_new

    @pl.when(kv != qi)
    def _interior_tile():           # strictly below the diagonal: no per-element mask
        update(apply_mask=False)

    @pl.when(kv == qi)
    def _diag_tile_and_finalize():  # diagonal tile == last step for this q row
        update(apply_mask=True)
        # Deferred softmax normalization (exact reciprocal keeps tight tolerances).
        inv_l = pl.reciprocal(l_ref[...], approx=False)               # (bq, 1)
        o_ref[...] = (acc_ref[...] * inv_l).astype(o_ref.dtype)

    # TODO(synk): nn.Dropout on attn_weights is identity in eval mode; training-mode
    # dropout is not applied here (would need pltpu.prng_seed/prng_random_bits).


# ----------------------------------------------------------------------------
# Wrapper
# ----------------------------------------------------------------------------
def causal_attention(x, w_query, w_key, w_value, *, block=256):
    """x: (B, T, d_in); w_*: (d_in, d_out). Returns (B, T, d_out)."""
    B, T, d_in = x.shape
    d_out = w_query.shape[1]
    scale = 1.0 / math.sqrt(d_out)

    # Tile / padding: token tile a multiple of 16 (covers bf16 sublane packing),
    # feature dims padded to multiples of 128 so every store is lane-dense.
    block = min(block, _round_up(T, 16))
    T_pad = _round_up(T, block)
    d_in_pad = _round_up(d_in, 128)
    d_out_pad = _round_up(d_out, 128)
    n_t = T_pad // block

    x_p = jnp.pad(x, ((0, 0), (0, T_pad - T), (0, d_in_pad - d_in)))
    pad_w = ((0, d_in_pad - d_in), (0, d_out_pad - d_out))
    w_cat = jnp.concatenate([jnp.pad(w_query, pad_w),
                             jnp.pad(w_key, pad_w),
                             jnp.pad(w_value, pad_w)], axis=1)   # (d_in_pad, 3*d_out_pad)

    qkv_shape = jax.ShapeDtypeStruct((B, T_pad, d_out_pad), x.dtype)
    tok_in = pl.BlockSpec((pl.Squeezed(), block, d_in_pad), lambda b, i: (b, i, 0))
    w_spec = pl.BlockSpec((d_in_pad, 3 * d_out_pad), lambda b, i: (0, 0))
    tok_out = pl.BlockSpec((pl.Squeezed(), block, d_out_pad), lambda b, i: (b, i, 0))

    # ---- Kernel 1: fused Q/K/V projection (one wide matmul per token tile) ----
    q, k, v = pl.pallas_call(
        functools.partial(_qkv_proj_kernel, scale=scale, d_out_pad=d_out_pad),
        out_shape=(qkv_shape, qkv_shape, qkv_shape),
        grid_spec=pltpu.PrefetchScalarGridSpec(
            num_scalar_prefetch=0,
            grid=(B, n_t),
            in_specs=[tok_in, w_spec],
            out_specs=(tok_out, tok_out, tok_out),
        ),
        compiler_params=pltpu.CompilerParams(
            dimension_semantics=("parallel", "parallel"),
            vmem_limit_bytes=32 * 1024 * 1024),
    )(x_p, w_cat)

    # ---- Kernel 2: flash attention on the lower-triangular (q,kv) step list ----
    # step -> (q_tile, kv_tile) lookup tables; fully-masked pairs never exist.
    qi_idx, kv_idx = np.tril_indices(n_t)        # row-major: qi ascending, kv = 0..qi
    qi_map = jnp.asarray(qi_idx, dtype=jnp.int32)
    kv_map = jnp.asarray(kv_idx, dtype=jnp.int32)
    n_steps = int(qi_map.shape[0])               # n_t * (n_t + 1) // 2

    q_spec = pl.BlockSpec((pl.Squeezed(), block, d_out_pad),
                          lambda b, s, qi_m, kv_m: (b, qi_m[s], 0))
    kv_spec = pl.BlockSpec((pl.Squeezed(), block, d_out_pad),
                           lambda b, s, qi_m, kv_m: (b, kv_m[s], 0))
    o_spec = pl.BlockSpec((pl.Squeezed(), block, d_out_pad),
                          lambda b, s, qi_m, kv_m: (b, qi_m[s], 0))

    out = pl.pallas_call(
        functools.partial(_flash_attn_kernel, block_q=block, block_k=block),
        out_shape=jax.ShapeDtypeStruct((B, T_pad, d_out_pad), x.dtype),
        grid_spec=pltpu.PrefetchScalarGridSpec(
            num_scalar_prefetch=2,
            grid=(B, n_steps),
            in_specs=[q_spec, kv_spec, kv_spec],
            out_specs=o_spec,
            scratch_shapes=[
                pltpu.VMEM((block, 1), jnp.float32),           # m (running max)
                pltpu.VMEM((block, 1), jnp.float32),           # l (running sum)
                pltpu.VMEM((block, d_out_pad), jnp.float32),   # acc
            ],
        ),
        compiler_params=pltpu.CompilerParams(
            # Note: q-tile parallelism is folded into the (arbitrary) step axis;
            # megacore sharding comes from the batch axis.  For B=1 and short T a
            # clamped 3-D grid would keep both TensorCores busy instead.
            dimension_semantics=("parallel", "arbitrary"),
            vmem_limit_bytes=32 * 1024 * 1024),
    )(qi_map, kv_map, q, k, v)

    return out[:, :T, :d_out]


# ----------------------------------------------------------------------------
# Pure-JAX reference (same math as the PyTorch module, eval mode)
# ----------------------------------------------------------------------------
def causal_attention_ref(x, w_query, w_key, w_value):
    q = x @ w_query
    k = x @ w_key
    v = x @ w_value
    d_out = w_query.shape[1]
    scores = jnp.einsum("btd,bsd->bts", q, k)
    T = x.shape[1]
    mask = jnp.triu(jnp.ones((T, T), dtype=bool), k=1)
    scores = jnp.where(mask[None], -jnp.inf, scores)
    attn = jax.nn.softmax(scores / math.sqrt(d_out), axis=-1)
    return jnp.einsum("bts,bsd->btd", attn, v)


if __name__ == "__main__":
    # --- Test 1: exact chapter shapes (6 tokens, d_in=3, d_out=2, batch of 2) ---
    inputs = jnp.array(
        [[0.43, 0.15, 0.89],
         [0.55, 0.87, 0.66],
         [0.57, 0.85, 0.64],
         [0.22, 0.58, 0.33],
         [0.77, 0.25, 0.10],
         [0.05, 0.80, 0.55]], dtype=jnp.float32)
    x = jnp.stack([inputs, inputs], axis=0)          # (B=2, T=6, d_in=3)

    d_in, d_out = 3, 2
    key = jax.random.PRNGKey(0)
    kq, kk, kv_ = jax.random.split(key, 3)
    bound = 1.0 / math.sqrt(d_in)
    w_query = jax.random.uniform(kq, (d_in, d_out), jnp.float32, -bound, bound)
    w_key = jax.random.uniform(kk, (d_in, d_out), jnp.float32, -bound, bound)
    w_value = jax.random.uniform(kv_, (d_in, d_out), jnp.float32, -bound, bound)

    out = jax.block_until_ready(causal_attention(x, w_query, w_key, w_value))
    ref = causal_attention_ref(x, w_query, w_key, w_value)
    assert out.shape == (2, 6, 2)
    assert jnp.allclose(out, ref, atol=1e-5, rtol=1e-5), (out, ref)

    # --- Test 2: larger, non-multiple T that exercises the triangular grid,
    #             interior/diagonal tiles, and the padding path (T_pad=512, n_t=2) ---
    B2, T2, din2, dout2 = 2, 320, 64, 32
    k1, k2, k3, k4 = jax.random.split(jax.random.PRNGKey(0), 4)
    x2 = jax.random.normal(k1, (B2, T2, din2), jnp.float32)
    b2 = 1.0 / math.sqrt(din2)
    wq2 = jax.random.uniform(k2, (din2, dout2), jnp.float32, -b2, b2)
    wk2 = jax.random.uniform(k3, (din2, dout2), jnp.float32, -b2, b2)
    wv2 = jax.random.uniform(k4, (din2, dout2), jnp.float32, -b2, b2)

    out2 = jax.block_until_ready(causal_attention(x2, wq2, wk2, wv2))
    ref2 = causal_attention_ref(x2, wq2, wk2, wv2)
    assert out2.shape == (B2, T2, dout2)
    assert jnp.allclose(out2, ref2, atol=1e-4, rtol=1e-4)

    print("KERNEL_OK")
</pallas_src>

<mosaic_0001>
module attributes {stable_mosaic.version = 11 : i64} {
  func.func @_qkv_proj_kernel(%arg0: i32, %arg1: i32, %arg2: memref<1x16x128xf32, #tpu.memory_space<vmem>>, %arg3: memref<128x384xf32, #tpu.memory_space<vmem>>, %arg4: memref<1x16x128xf32, #tpu.memory_space<vmem>>, %arg5: memref<1x16x128xf32, #tpu.memory_space<vmem>>, %arg6: memref<1x16x128xf32, #tpu.memory_space<vmem>>) attributes {dimension_semantics = [#tpu.dimension_semantics<parallel>, #tpu.dimension_semantics<parallel>], iteration_bounds = array<i64: 2, 1>, scalar_prefetch = 0 : i64, scratch_operands = 0 : i64, tpu.core_type = #tpu.core_type<tc>, window_params = [{transform_indices = @transform_0, window_bounds = array<i64: 1, 16, 128>}, {pipeline_mode = #tpu.pipeline_mode<synchronous>, transform_indices = @transform_1, window_bounds = array<i64: 128, 384>}, {transform_indices = @transform_2, window_bounds = array<i64: 1, 16, 128>}, {transform_indices = @transform_3, window_bounds = array<i64: 1, 16, 128>}, {transform_indices = @transform_4, window_bounds = array<i64: 1, 16, 128>}]} {
    %c0 = arith.constant 0 : index
    %c0_0 = arith.constant 0 : index
    %c0_1 = arith.constant 0 : index
    %0 = vector.load %arg2[%c0, %c0_0, %c0_1] : memref<1x16x128xf32, #tpu.memory_space<vmem>>, vector<1x16x128xf32>
    %1 = vector.shape_cast %0 : vector<1x16x128xf32> to vector<16x128xf32>
    %c0_2 = arith.constant 0 : index
    %c0_3 = arith.constant 0 : index
    %2 = vector.load %arg3[%c0_2, %c0_3] : memref<128x384xf32, #tpu.memory_space<vmem>>, vector<128x384xf32>
    %cst = arith.constant dense<0.000000e+00> : vector<16x384xf32>
    %3 = tpu.matmul %1, %2, %cst {dimension_numbers = #tpu.dot_dimension_numbers<[1], [0], [0], [1], [0, 0, 1, 1], [], []>} : vector<16x128xf32>, vector<128x384xf32>, vector<16x384xf32> -> vector<16x384xf32>
    %4 = vector.extract_strided_slice %3 {offsets = [0, 0], sizes = [16, 128], strides = [1, 1]} : vector<16x384xf32> to vector<16x128xf32>
    %cst_4 = arith.constant 0.707106769 : f32
    %5 = vector.broadcast %cst_4 : f32 to vector<16x128xf32>
    %6 = arith.mulf %4, %5 : vector<16x128xf32>
    %c0_5 = arith.constant 0 : index
    %c0_6 = arith.constant 0 : index
    %c0_7 = arith.constant 0 : index
    %7 = vector.load %arg4[%c0_5, %c0_6, %c0_7] : memref<1x16x128xf32, #tpu.memory_space<vmem>>, vector<1x16x128xf32>
    %8 = vector.shape_cast %7 : vector<1x16x128xf32> to vector<16x128xf32>
    %9 = vector.shape_cast %6 : vector<16x128xf32> to vector<1x16x128xf32>
    tpu.vector_store %arg4[%c0_5, %c0_6, %c0_7], %9 {strides = array<i32>} : memref<1x16x128xf32, #tpu.memory_space<vmem>>, vector<1x16x128xf32>,
    %10 = vector.extract_strided_slice %3 {offsets = [0, 128], sizes = [16, 128], strides = [1, 1]} : vector<16x384xf32> to vector<16x128xf32>
    %c0_8 = arith.constant 0 : index
    %c0_9 = arith.constant 0 : index
    %c0_10 = arith.constant 0 : index
    %11 = vector.load %arg5[%c0_8, %c0_9, %c0_10] : memref<1x16x128xf32, #tpu.memory_space<vmem>>, vector<1x16x128xf32>
    %12 = vector.shape_cast %11 : vector<1x16x128xf32> to vector<16x128xf32>
    %13 = vector.shape_cast %10 : vector<16x128xf32> to vector<1x16x128xf32>
    tpu.vector_store %arg5[%c0_8, %c0_9, %c0_10], %13 {strides = array<i32>} : memref<1x16x128xf32, #tpu.memory_space<vmem>>, vector<1x16x128xf32>,
    %14 = vector.extract_strided_slice %3 {offsets = [0, 256], sizes = [16, 128], strides = [1, 1]} : vector<16x384xf32> to vector<16x128xf32>
    %c0_11 = arith.constant 0 : index
    %c0_12 = arith.constant 0 : index
    %c0_13 = arith.constant 0 : index
    %15 = vector.load %arg6[%c0_11, %c0_12, %c0_13] : memref<1x16x128xf32, #tpu.memory_space<vmem>>, vector<1x16x128xf32>
    %16 = vector.shape_cast %15 : vector<1x16x128xf32> to vector<16x128xf32>
    %17 = vector.shape_cast %14 : vector<16x128xf32> to vector<1x16x128xf32>
    tpu.vector_store %arg6[%c0_11, %c0_12, %c0_13], %17 {strides = array<i32>} : memref<1x16x128xf32, #tpu.memory_space<vmem>>, vector<1x16x128xf32>,
    return
  }
  func.func @transform_0(%arg0: i32, %arg1: i32) -> (i32, i32, i32) {
    %c0_i32 = arith.constant 0 : i32
    %c0_i32_0 = arith.constant 0 : i32
    return %arg0, %arg1, %c0_i32 : i32, i32, i32
  }
  func.func @transform_1(%arg0: i32, %arg1: i32) -> (i32, i32) {
    %c0_i32 = arith.constant 0 : i32
    %c0_i32_0 = arith.constant 0 : i32
    %c0_i32_1 = arith.constant 0 : i32
    return %c0_i32, %c0_i32_0 : i32, i32
  }
  func.func @transform_2(%arg0: i32, %arg1: i32) -> (i32, i32, i32) {
    %c0_i32 = arith.constant 0 : i32
    %c0_i32_0 = arith.constant 0 : i32
    return %arg0, %arg1, %c0_i32 : i32, i32, i32
  }
  func.func @transform_3(%arg0: i32, %arg1: i32) -> (i32, i32, i32) {
    %c0_i32 = arith.constant 0 : i32
    %c0_i32_0 = arith.constant 0 : i32
    return %arg0, %arg1, %c0_i32 : i32, i32, i32
  }
  func.func @transform_4(%arg0: i32, %arg1: i32) -> (i32, i32, i32) {
    %c0_i32 = arith.constant 0 : i32
    %c0_i32_0 = arith.constant 0 : i32
    return %arg0, %arg1, %c0_i32 : i32, i32, i32
  }
}

</mosaic_0001>

<llo_original>
// kernel: tpu_custom_call.1
$region0: #{tpu_custom_call.1}
  #allocation0 [shape = 'u32[]', space=smem, size = 0x4, offset = 0x4, fixed_abs, tag = 'smem constant byte address 0x4 - core index']
  #allocation1 [shape = 'u32[144,128]{1,0:T(1,128)}', space=vmem, size = 0x12000, scoped, tag = 'internal scratch']
  %s0 = inlined_call_operand.hbm [shape: f32[2,16,128], index: 0, kind: input, shape index: {}]
  %s1 = inlined_call_operand.hbm [shape: f32[128,384], index: 1, kind: input, shape index: {}]
  %s2 = inlined_call_operand.hbm [shape: f32[2,16,128], index: 2, kind: output, shape index: {0}]
  %s3 = inlined_call_operand.hbm [shape: f32[2,16,128], index: 3, kind: output, shape index: {1}]
  %s4 = inlined_call_operand.hbm [shape: f32[2,16,128], index: 4, kind: output, shape index: {2}]
  %5 = xla_tuple %s2, %s3, %s4
  %s6 = sld [smem:[#allocation0]]
  $region65: #{tpu_custom_call.1} parent=0
    _
  %s8 = ssub.s32 1, %s6
  %s9 = scalar_select 0, %s8, %s6
  $region1: #{tpu_custom_call.1} parent=0
    #allocation2 [shape = 'u8[16384]{0}', space=vmem, size = 0x4000, scoped, tag = 'input window, operand 0']
    #allocation3 [shape = 's32[2]{0}', space=sflag, size = 0x8, scoped, tag = 'scoped memory for tpu_custom_call.1']
    #allocation4 [shape = 's32[2]{0}', space=sflag, size = 0x8, scoped, tag = 'scoped memory for tpu_custom_call.1']
    #allocation5 [shape = 'u8[196608]{0}', space=vmem, size = 0x30000, scoped, tag = 'input window, operand 1, single buffered']
    #allocation6 [shape = 's32[1]{0}', space=sflag, size = 0x4, scoped, tag = 'scoped memory for tpu_custom_call.1']
    #allocation7 [shape = 'u8[16384]{0}', space=vmem, size = 0x4000, scoped, tag = 'output window, operand 0']
    #allocation8 [shape = 'u8[16384]{0}', space=vmem, size = 0x4000, scoped, tag = 'output window, operand 1']
    #allocation9 [shape = 's32[2]{0}', space=sflag, size = 0x8, scoped, tag = 'scoped memory for tpu_custom_call.1']
    #allocation10 [shape = 'u8[16384]{0}', space=vmem, size = 0x4000, scoped, tag = 'output window, operand 2']
    %10 = vsyncpa [#allocation3], 0
    %s11 = scalar_lea.sflag [#allocation3], 1
    %12 = vsyncpa %s11, 0
    %13 = vsyncpa [#allocation6], 0
    %14 = vsyncpa [#allocation4], 0
    %s15 = scalar_lea.sflag [#allocation4], 1
    %16 = vsyncpa %s15, 0
    %17 = vsyncpa [#allocation9], 0
    %s18 = scalar_lea.sflag [#allocation9], 1
    %19 = vsyncpa %s18, 0
    loop: start=0, step=1, limit=4
    $region2: #{tpu_custom_call.1} parent=1 // loop_pre_header
      _
    $region3: #{tpu_custom_call.1} parent=1 // loop_header
      %s21 = sphi 0, %s25
      %p22 = scmp.ge.s32.totalorder %s21, 4
      %s28 = sphi 0, %s40
      %s29 = sphi 0, %s36
      %s30 = sphi 0, %s28
      %s31 = sphi 0, %s29
      %s32 = sphi 0, %s30
      %s33 = sphi 0, %s31
      %s45 = sphi 0, %s47
      %s48 = sphi 0, %s45
      %s49 = sphi 0, %s48
      %s65 = sphi 0, %s49
      %s69 = sphi 0, %s69
      %s71 = sphi 0, %s69
      %s72 = sphi 0, %s71
      %s86 = sphi 0, %s72
      %s94 = sphi 0, %s96
      %s97 = sphi 0, %s94
      %s98 = sphi 0, %s97
      %s114 = sphi 0, %s98
      %s122 = sphi 0, %s124
      %s125 = sphi 0, %s122
      %s126 = sphi 0, %s125
      %s142 = sphi 0, %s126
      %s150 = sphi 0, %s152
      %s153 = sphi 0, %s150
      %s154 = sphi 0, %s153
      %s170 = sphi 0, %s154
    $region4: #{tpu_custom_call.1} parent=1 // loop_header_branch
      %24 = sbr.rel (%p22) target = $region8
    $region5: #{tpu_custom_call.1} parent=1 // loop_body
      %s26 = ssub.s32 %s21, 1
      %s27 = ssub.s32 %s21, 2
      %s34 = sadd.s32 1, %s29
      %p35 = scmp.ge.s32.totalorder %s34, 1
      %s36 = scalar_select %p35, 0, %s34
      %s37 = sadd.s32 1, %s28
      %s38 = scalar_select %p35, %s37, %s28
      %p39 = scmp.ge.s32.totalorder %s38, 2
      %s40 = scalar_select %p39, 0, %s38
      %s41 = ssub.s32 %s28, %s40
      %s42 = ssub.s32 %s29, %s36
      %s43 = sor.u32 %s41, %s42
      %p44 = scmp.eq.s32.totalorder %s43, 0
      %s46 = sadd.s32 %s45, 1
      %s47 = scalar_select %p44, %s45, %s46
      %p50 = pneg %p44
      %p51 = scmp.eq.s32.totalorder %s21, 1
      %p52 = por %p50, %p51
      %p53 = scmp.ne.s32.totalorder %s45, %s48
      %p54 = scmp.eq.s32.totalorder %s21, 0
      %p55 = por %p53, %p54
      %p56 = scmp.ne.s32.totalorder %s45, %s48
      %p57 = scmp.eq.s32.totalorder %s26, 1
      %p58 = por %p56, %p57
      %p59 = scmp.ne.s32.totalorder %s48, %s49
      %p60 = scmp.eq.s32.totalorder %s26, 0
      %p61 = por %p59, %p60
      %p62 = scmp.ne.s32.totalorder %s48, %s49
      %p63 = scmp.eq.s32.totalorder %s27, 1
      %p64 = por %p62, %p63
      %p66 = scmp.ne.s32.totalorder %s49, %s65
      %p67 = scmp.eq.s32.totalorder %s27, 0
      %p68 = por %p66, %p67
      %s70 = sadd.s32 %s69, 1
      %p73 = scmp.eq.s32.totalorder %s21, 1
      %p74 = scmp.ne.s32.totalorder %s69, %s71
      %p75 = scmp.eq.s32.totalorder %s21, 0
      %p76 = por %p74, %p75
      %p77 = scmp.ne.s32.totalorder %s69, %s71
      %p78 = scmp.eq.s32.totalorder %s26, 1
      %p79 = por %p77, %p78
      %p80 = scmp.ne.s32.totalorder %s71, %s72
      %p81 = scmp.eq.s32.totalorder %s26, 0
      %p82 = por %p80, %p81
      %p83 = scmp.ne.s32.totalorder %s71, %s72
      %p84 = scmp.eq.s32.totalorder %s27, 1
      %p85 = por %p83, %p84
      %p87 = scmp.ne.s32.totalorder %s72, %s86
      %p88 = scmp.eq.s32.totalorder %s27, 0
      %p89 = por %p87, %p88
      %s90 = ssub.s32 %s28, %s40
      %s91 = ssub.s32 %s29, %s36
      %s92 = sor.u32 %s90, %s91
      %p93 = scmp.eq.s32.totalorder %s92, 0
      %s95 = sadd.s32 %s94, 1
      %s96 = scalar_select %p93, %s94, %s95
      %p99 = pneg %p93
      %p100 = scmp.eq.s32.totalorder %s21, 1
      %p101 = por %p99, %p100
      %p102 = scmp.ne.s32.totalorder %s94, %s97
      %p103 = scmp.eq.s32.totalorder %s21, 0
      %p104 = por %p102, %p103
      %p105 = scmp.ne.s32.totalorder %s94, %s97
      %p106 = scmp.eq.s32.totalorder %s26, 1
      %p107 = por %p105, %p106
      %p108 = scmp.ne.s32.totalorder %s97, %s98
      %p109 = scmp.eq.s32.totalorder %s26, 0
      %p110 = por %p108, %p109
      %p111 = scmp.ne.s32.totalorder %s97, %s98
      %p112 = scmp.eq.s32.totalorder %s27, 1
      %p113 = por %p111, %p112
      %p115 = scmp.ne.s32.totalorder %s98, %s114
      %p116 = scmp.eq.s32.totalorder %s27, 0
      %p117 = por %p115, %p116
      %s118 = ssub.s32 %s28, %s40
      %s119 = ssub.s32 %s29, %s36
      %s120 = sor.u32 %s118, %s119
      %p121 = scmp.eq.s32.totalorder %s120, 0
      %s123 = sadd.s32 %s122, 1
      %s124 = scalar_select %p121, %s122, %s123
      %p127 = pneg %p121
      %p128 = scmp.eq.s32.totalorder %s21, 1
      %p129 = por %p127, %p128
      %p130 = scmp.ne.s32.totalorder %s122, %s125
      %p131 = scmp.eq.s32.totalorder %s21, 0
      %p132 = por %p130, %p131
      %p133 = scmp.ne.s32.totalorder %s122, %s125
      %p134 = scmp.eq.s32.totalorder %s26, 1
      %p135 = por %p133, %p134
      %p136 = scmp.ne.s32.totalorder %s125, %s126
      %p137 = scmp.eq.s32.totalorder %s26, 0
      %p138 = por %p136, %p137
      %p139 = scmp.ne.s32.totalorder %s125, %s126
      %p140 = scmp.eq.s32.totalorder %s27, 1
      %p141 = por %p139, %p140
      %p143 = scmp.ne.s32.totalorder %s126, %s142
      %p144 = scmp.eq.s32.totalorder %s27, 0
      %p145 = por %p143, %p144
      %s146 = ssub.s32 %s28, %s40
      %s147 = ssub.s32 %s29, %s36
      %s148 = sor.u32 %s146, %s147
      %p149 = scmp.eq.s32.totalorder %s148, 0
      %s151 = sadd.s32 %s150, 1
      %s152 = scalar_select %p149, %s150, %s151
      %p155 = pneg %p149
      %p156 = scmp.eq.s32.totalorder %s21, 1
      %p157 = por %p155, %p156
      %p158 = scmp.ne.s32.totalorder %s150, %s153
      %p159 = scmp.eq.s32.totalorder %s21, 0
      %p160 = por %p158, %p159
      %p161 = scmp.ne.s32.totalorder %s150, %s153
      %p162 = scmp.eq.s32.totalorder %s26, 1
      %p163 = por %p161, %p162
      %p164 = scmp.ne.s32.totalorder %s153, %s154
      %p165 = scmp.eq.s32.totalorder %s26, 0
      %p166 = por %p164, %p165
      %p167 = scmp.ne.s32.totalorder %s153, %s154
      %p168 = scmp.eq.s32.totalorder %s27, 1
      %p169 = por %p167, %p168
      %p171 = scmp.ne.s32.totalorder %s154, %s170
      %p172 = scmp.eq.s32.totalorder %s27, 0
      %p173 = por %p171, %p172
      %p174 = scmp.le.s32.totalorder 1, %s21
      %p175 = scmp.lt.s32.totalorder %s21, 3
      %p176 = pnand %p174, %p175
      %p177 = pneg %p176
      // Predicated region
      $region9: #{tpu_custom_call.1} parent=5 // pred_check
        _
      $region10: #{tpu_custom_call.1} parent=5 // pred_check_branch
        %179 = sbr.rel (%p176) target = $region12
      $region11: #{tpu_custom_call.1} parent=5 // pred_region
        %s180 = ssub.s32 %s21, 1
        // Predicated region
        $region13: #{tpu_custom_call.1} parent=11 // pred_check
          %p181 = pneg %p82
        $region14: #{tpu_custom_call.1} parent=11 // pred_check_branch
          %183 = sbr.rel (%p181) target = $region16
        $region15: #{tpu_custom_call.1} parent=11 // pred_region
          %s185 = ssub.s32 6144, 6144
          %186 = vsyncadd [#allocation6], %s185
          %s187 = sshll.u32 [#allocation5], 4
          %s188 = int_to_ptr.vmem [resolvable:$true] %s187
          %193 = dma.hbm_to_vmem [thread:$0]  %s1, 6144, %s188, [#allocation6], 384, 384, 24
        $region16: #{tpu_custom_call.1} parent=11 // pred_fallthru
          _
      $region12: #{tpu_custom_call.1} parent=5 // pred_fallthru
        _
      %p194 = scmp.lt.s32.totalorder %s21, 2
      // Predicated region
      $region17: #{tpu_custom_call.1} parent=5 // pred_check
        %p195 = pneg %p194
      $region18: #{tpu_custom_call.1} parent=5 // pred_check_branch
        %197 = sbr.rel (%p195) target = $region20
      $region19: #{tpu_custom_call.1} parent=5 // pred_region
        // Predicated region
        $region21: #{tpu_custom_call.1} parent=19 // pred_check
          %p198 = pneg %p55
        $region22: #{tpu_custom_call.1} parent=19 // pred_check_branch
          %200 = sbr.rel (%p198) target = $region24
        $region23: #{tpu_custom_call.1} parent=19 // pred_region
          %s201 = sand.u32 %s45, 1
          %s202 = scalar_lea.sflag [#allocation3], %s201
          %s203 = sand.u32 %s45, 1
          %s204 = smul.addr %s203, 16
          %s205 = scalar_lea.vmem [#allocation2], %s204
          %s206 = smul.u32 2, %s29
          %s208 = ssub.s32 256, 256
          %209 = vsyncadd %s202, %s208
          %s210 = smul.addr %s28, 2
          %s211 = sadd.s32 %s206, %s210
          %s212 = smul.addr %s211, 128
          %s213 = scalar_lea.hbm %s0, %s212
          %s214 = sshll.u32 %s205, 4
          %s215 = int_to_ptr.vmem [resolvable:$true] %s214
          %220 = dma.hbm_to_vmem [thread:$0]  %s213, 256, %s215, %s202, 128, 128, 8
        $region24: #{tpu_custom_call.1} parent=19 // pred_fallthru
          _
      $region20: #{tpu_custom_call.1} parent=5 // pred_fallthru
        _
      %p221 = scmp.le.s32.totalorder 1, %s21
      %p222 = scmp.lt.s32.totalorder %s21, 3
      %p223 = pnand %p221, %p222
      %p224 = pneg %p223
      // Predicated region
      $region25: #{tpu_custom_call.1} parent=5 // pred_check
        _
      $region26: #{tpu_custom_call.1} parent=5 // pred_check_branch
        %226 = sbr.rel (%p223) target = $region28
      $region27: #{tpu_custom_call.1} parent=5 // pred_region
        %s227 = ssub.s32 %s21, 1
        %s228 = sand.u32 %s48, 1
        %s229 = scalar_lea.sflag [#allocation3], %s228
        %s230 = sand.u32 %s48, 1
        %s231 = smul.addr %s230, 16
        %s232 = scalar_lea.vmem [#allocation2], %s231
        // Predicated region
        $region29: #{tpu_custom_call.1} parent=27 // pred_check
          %p233 = pneg %p61
        $region30: #{tpu_custom_call.1} parent=27 // pred_check_branch
          %235 = sbr.rel (%p233) target = $region32
        $region31: #{tpu_custom_call.1} parent=27 // pred_region
          %236 = dma.done %s229, 256
        $region32: #{tpu_custom_call.1} parent=27 // pred_fallthru
          _
        // Predicated region
        $region33: #{tpu_custom_call.1} parent=27 // pred_check
          %p237 = pneg %p82
        $region34: #{tpu_custom_call.1} parent=27 // pred_check_branch
          %239 = sbr.rel (%p237) target = $region36
        $region35: #{tpu_custom_call.1} parent=27 // pred_region
          %240 = dma.done [#allocation6], 6144
        $region36: #{tpu_custom_call.1} parent=27 // pred_fallthru
          _
        %s241 = sand.u32 %s48, 1
        %s242 = scalar_lea.sflag [#allocation3], %s241
        %s243 = sand.u32 %s48, 1
        %s244 = smul.addr %s243, 16
        %s245 = scalar_lea.vmem [#allocation2], %s244
        %p246 = pneg %p61
        %p247 = pneg %p58
        %p248 = pneg %p82
        %p249 = pneg %p79
        %p250 = pneg %p110
        %p251 = pneg %p107
        %s252 = sand.u32 %s97, 1
        %s253 = scalar_lea.sflag [#allocation4], %s252
        %s254 = sand.u32 %s97, 1
        %s255 = smul.addr %s254, 16
        %s256 = scalar_lea.vmem [#allocation7], %s255
        %p257 = pneg %p138
        %p258 = pneg %p135
        %s259 = sand.u32 %s26, 1
        %s260 = scalar_lea.sflag [#allocation9], %s259
        %s261 = sand.u32 %s125, 1
        %s262 = smul.addr %s261, 16
        %s263 = scalar_lea.vmem [#allocation8], %s262
        %p264 = pneg %p166
        %p265 = pneg %p163
        %s266 = sand.u32 %s26, 1
        %s267 = scalar_lea.sflag [#allocation9], %s266
        %s268 = sand.u32 %s153, 1
        %s269 = smul.addr %s268, 16
        %s270 = scalar_lea.vmem [#allocation10], %s269
        %s271 = smul.u32 2, %s31
        %s272 = smul.u32 2, %s31
        %s273 = smul.u32 2, %s31
        %s274 = smul.u32 2, %s31
        %v275 = vld [vmem:[%s232] sm:$0xff]
        %v276 = vld [vmem:[%s232 + $0x8] sm:$0xff]
        %v277 = vld [vmem:[#allocation5] sm:$0xff]
        %v278 = vld [vmem:[#allocation5 + $0x8] sm:$0xff]
        %v279 = vld [vmem:[#allocation5 + $0x10] sm:$0xff]
        %v280 = vld [vmem:[#allocation5 + $0x18] sm:$0xff]
        %v281 = vld [vmem:[#allocation5 + $0x20] sm:$0xff]
        %v282 = vld [vmem:[#allocation5 + $0x28] sm:$0xff]
        %v283 = vld [vmem:[#allocation5 + $0x30] sm:$0xff]
        %v284 = vld [vmem:[#allocation5 + $0x38] sm:$0xff]
        %v285 = vld [vmem:[#allocation5 + $0x40] sm:$0xff]
        %v286 = vld [vmem:[#allocation5 + $0x48] sm:$0xff]
        %v287 = vld [vmem:[#allocation5 + $0x50] sm:$0xff]
        %v288 = vld [vmem:[#allocation5 + $0x58] sm:$0xff]
        %v289 = vld [vmem:[#allocation5 + $0x60] sm:$0xff]
        %v290 = vld [vmem:[#allocation5 + $0x68] sm:$0xff]
        %v291 = vld [vmem:[#allocation5 + $0x70] sm:$0xff]
        %v292 = vld [vmem:[#allocation5 + $0x78] sm:$0xff]
        %v293 = vld [vmem:[#allocation5 + $0x80] sm:$0xff]
        %v294 = vld [vmem:[#allocation5 + $0x88] sm:$0xff]
        %v295 = vld [vmem:[#allocation5 + $0x90] sm:$0xff]
        %v296 = vld [vmem:[#allocation5 + $0x98] sm:$0xff]
        %v297 = vld [vmem:[#allocation5 + $0xa0] sm:$0xff]
        %v298 = vld [vmem:[#allocation5 + $0xa8] sm:$0xff]
        %v299 = vld [vmem:[#allocation5 + $0xb0] sm:$0xff]
        %v300 = vld [vmem:[#allocation5 + $0xb8] sm:$0xff]
        %v301 = vld [vmem:[#allocation5 + $0xc0] sm:$0xff]
        %v302 = vld [vmem:[#allocation5 + $0xc8] sm:$0xff]
        %v303 = vld [vmem:[#allocation5 + $0xd0] sm:$0xff]
        %v304 = vld [vmem:[#allocation5 + $0xd8] sm:$0xff]
        %v305 = vld [vmem:[#allocation5 + $0xe0] sm:$0xff]
        %v306 = vld [vmem:[#allocation5 + $0xe8] sm:$0xff]
        %v307 = vld [vmem:[#allocation5 + $0xf0] sm:$0xff]
        %v308 = vld [vmem:[#allocation5 + $0xf8] sm:$0xff]
        %v309 = vld [vmem:[#allocation5 + $0x100] sm:$0xff]
        %v310 = vld [vmem:[#allocation5 + $0x108] sm:$0xff]
        %v311 = vld [vmem:[#allocation5 + $0x110] sm:$0xff]
        %v312 = vld [vmem:[#allocation5 + $0x118] sm:$0xff]
        %v313 = vld [vmem:[#allocation5 + $0x120] sm:$0xff]
        %v314 = vld [vmem:[#allocation5 + $0x128] sm:$0xff]
        %v315 = vld [vmem:[#allocation5 + $0x130] sm:$0xff]
        %v316 = vld [vmem:[#allocation5 + $0x138] sm:$0xff]
        %v317 = vld [vmem:[#allocation5 + $0x140] sm:$0xff]
        %v318 = vld [vmem:[#allocation5 + $0x148] sm:$0xff]
        %v319 = vld [vmem:[#allocation5 + $0x150] sm:$0xff]
        %v320 = vld [vmem:[#allocation5 + $0x158] sm:$0xff]
        %v321 = vld [vmem:[#allocation5 + $0x160] sm:$0xff]
        %v322 = vld [vmem:[#allocation5 + $0x168] sm:$0xff]
        %v323 = vld [vmem:[#allocation5 + $0x170] sm:$0xff]
        %v324 = vld [vmem:[#allocation5 + $0x178] sm:$0xff]
        %325 = vmatprep.subr.mxu0 %v278
        %326 = vmatpush1.msra.mxu0 %v277
        %327 = vmatprep.subr.mxu0 %v281
        %328 = vmatpush1.msra.mxu0 %v280
        %329 = vmatprep.subr.mxu0 %v284
        %330 = vmatpush1.msra.mxu0 %v283
        %331 = vmatprep.subr.mxu0 %v287
        %332 = vmatpush1.msra.mxu0 %v286
        %333 = vmatprep.subr.mxu0 %v290
        %334 = vmatpush1.msra.mxu0 %v289
        %335 = vmatprep.subr.mxu0 %v293
        %336 = vmatpush1.msra.mxu0 %v292
        %337 = vmatprep.subr.mxu0 %v296
        %338 = vmatpush1.msra.mxu0 %v295
        %339 = vmatprep.subr.mxu0 %v299
        %340 = vmatpush1.msra.mxu0 %v298
        %341 = vmatprep.subr.mxu0 %v302
        %342 = vmatpush1.msra.mxu0 %v301
        %343 = vmatprep.subr.mxu0 %v305
        %344 = vmatpush1.msra.mxu0 %v304
        %345 = vmatprep.subr.mxu0 %v308
        %346 = vmatpush1.msra.mxu0 %v307
        %347 = vmatprep.subr.mxu0 %v311
        %348 = vmatpush1.msra.mxu0 %v310
        %349 = vmatprep.subr.mxu0 %v314
        %350 = vmatpush1.msra.mxu0 %v313
        %351 = vmatprep.subr.mxu0 %v317
        %352 = vmatpush1.msra.mxu0 %v316
        %353 = vmatprep.subr.mxu0 %v320
        %354 = vmatpush1.msra.mxu0 %v319
        %355 = vmatprep.subr.mxu0 %v323
        %356 = vmatpush1.msra.mxu0 %v322
        %357 = vmatprep.subr.mxu0 0.0
        %358 = vmatpush1.msra.mxu0 0.0
        %359 = vmatprep.subr.mxu0 0.0
        %360 = vmatpush1.msra.mxu0 0.0
        %361 = vmatprep.subr.mxu0 0.0
        %362 = vmatpush1.msra.mxu0 0.0
        %363 = vmatprep.subr.mxu0 0.0
        %364 = vmatpush1.msra.mxu0 0.0
        %365 = vmatprep.subr.mxu0 0.0
        %366 = vmatpush1.msra.mxu0 0.0
        %367 = vmatprep.subr.mxu0 0.0
        %368 = vmatpush1.msra.mxu0 0.0
        %369 = vmatprep.subr.mxu0 0.0
        %370 = vmatpush1.msra.mxu0 0.0
        %371 = vmatprep.subr.mxu0 0.0
        %372 = vmatpush1.msra.mxu0 0.0
        %373 = vmatprep.subr.mxu0 0.0
        %374 = vmatpush1.msra.mxu0 0.0
        %375 = vmatprep.subr.mxu0 0.0
        %376 = vmatpush1.msra.mxu0 0.0
        %377 = vmatprep.subr.mxu0 0.0
        %378 = vmatpush1.msra.mxu0 0.0
        %379 = vmatprep.subr.mxu0 0.0
        %380 = vmatpush1.msra.mxu0 0.0
        %381 = vmatprep.subr.mxu0 0.0
        %382 = vmatpush1.msra.mxu0 0.0
        %383 = vmatprep.subr.mxu0 0.0
        %384 = vmatpush1.msra.mxu0 0.0
        %385 = vmatprep.subr.mxu0 0.0
        %386 = vmatpush1.msra.mxu0 0.0
        %387 = vmatprep.subr.mxu0 0.0
        %388 = vmatpush1.msra.mxu0 0.0
        %389 = vmatprep.mubr.f32.mxu0 0.0
        %390 = vmatmul.mubr.f32.gmra.mrb[0].mxu0 %v275
        %v391 = vpop.f32.mrb[0].mxu0
        %v392 = vadd.f32 0.0, %v391
        %v393 = vpop.f32.mrb[0].mxu0
        %v394 = vadd.f32 0.0, %v393
        %395 = vmatprep.mubr.f32.mxu0 0.0
        %396 = vmatmul.mubr.f32.gmra.mrb[0].mxu0 %v276
        %v397 = vpop.f32.mrb[0].mxu0
        %v398 = vadd.f32 0.0, %v397
        %v399 = vpop.f32.mrb[0].mxu0
        %v400 = vadd.f32 0.0, %v399
        %401 = vdwg.mxu0
        %402 = vmatprep.subr.mxu0 0.0
        %403 = vmatpush1.msra.mxu0 %v279
        %404 = vmatprep.subr.mxu0 0.0
        %405 = vmatpush1.msra.mxu0 %v282
        %406 = vmatprep.subr.mxu0 0.0
        %407 = vmatpush1.msra.mxu0 %v285
        %408 = vmatprep.subr.mxu0 0.0
        %409 = vmatpush1.msra.mxu0 %v288
        %410 = vmatprep.subr.mxu0 0.0
        %411 = vmatpush1.msra.mxu0 %v291
        %412 = vmatprep.subr.mxu0 0.0
        %413 = vmatpush1.msra.mxu0 %v294
        %414 = vmatprep.subr.mxu0 0.0
        %415 = vmatpush1.msra.mxu0 %v297
        %416 = vmatprep.subr.mxu0 0.0
        %417 = vmatpush1.msra.mxu0 %v300
        %418 = vmatprep.subr.mxu0 0.0
        %419 = vmatpush1.msra.mxu0 %v303
        %420 = vmatprep.subr.mxu0 0.0
        %421 = vmatpush1.msra.mxu0 %v306
        %422 = vmatprep.subr.mxu0 0.0
        %423 = vmatpush1.msra.mxu0 %v309
        %424 = vmatprep.subr.mxu0 0.0
        %425 = vmatpush1.msra.mxu0 %v312
        %426 = vmatprep.subr.mxu0 0.0
        %427 = vmatpush1.msra.mxu0 %v315
        %428 = vmatprep.subr.mxu0 0.0
        %429 = vmatpush1.msra.mxu0 %v318
        %430 = vmatprep.subr.mxu0 0.0
        %431 = vmatpush1.msra.mxu0 %v321
        %432 = vmatprep.subr.mxu0 0.0
        %433 = vmatpush1.msra.mxu0 %v324
        %434 = vmatprep.subr.mxu0 0.0
        %435 = vmatpush1.msra.mxu0 0.0
        %436 = vmatprep.subr.mxu0 0.0
        %437 = vmatpush1.msra.mxu0 0.0
        %438 = vmatprep.subr.mxu0 0.0
        %439 = vmatpush1.msra.mxu0 0.0
        %440 = vmatprep.subr.mxu0 0.0
        %441 = vmatpush1.msra.mxu0 0.0
        %442 = vmatprep.subr.mxu0 0.0
        %443 = vmatpush1.msra.mxu0 0.0
        %444 = vmatprep.subr.mxu0 0.0
        %445 = vmatpush1.msra.mxu0 0.0
        %446 = vmatprep.subr.mxu0 0.0
        %447 = vmatpush1.msra.mxu0 0.0
        %448 = vmatprep.subr.mxu0 0.0
        %449 = vmatpush1.msra.mxu0 0.0
        %450 = vmatprep.subr.mxu0 0.0
        %451 = vmatpush1.msra.mxu0 0.0
        %452 = vmatprep.subr.mxu0 0.0
        %453 = vmatpush1.msra.mxu0 0.0
        %454 = vmatprep.subr.mxu0 0.0
        %455 = vmatpush1.msra.mxu0 0.0
        %456 = vmatprep.subr.mxu0 0.0
        %457 = vmatpush1.msra.mxu0 0.0
        %458 = vmatprep.subr.mxu0 0.0
        %459 = vmatpush1.msra.mxu0 0.0
        %460 = vmatprep.subr.mxu0 0.0
        %461 = vmatpush1.msra.mxu0 0.0
        %462 = vmatprep.subr.mxu0 0.0
        %463 = vmatpush1.msra.mxu0 0.0
        %464 = vmatprep.subr.mxu0 0.0
        %465 = vmatpush1.msra.mxu0 0.0
        %466 = vmatprep.mubr.f32.mxu0 0.0
        %467 = vmatmul.mubr.f32.gmra.mrb[0].mxu0 %v275
        %v468 = vpop.f32.mrb[0].mxu0
        %v469 = vadd.f32 0.0, %v468
        %v470 = vpop.f32.mrb[0].mxu0
        %471 = vmatprep.mubr.f32.mxu0 0.0
        %472 = vmatmul.mubr.f32.gmra.mrb[0].mxu0 %v276
        %v473 = vpop.f32.mrb[0].mxu0
        %v474 = vadd.f32 0.0, %v473
        %v475 = vpop.f32.mrb[0].mxu0
        %476 = vdwg.mxu0
        %v477 = vmul.f32 %v392, 0.70710677
        %v478 = vmul.f32 %v398, 0.70710677
        %479 = vst [vmem:[%s256] sm:$0xff] %v477
        %480 = vst [vmem:[%s256 + $0x8] sm:$0xff] %v478
        %481 = vst [vmem:[%s263] sm:$0xff] %v394
        %482 = vst [vmem:[%s263 + $0x8] sm:$0xff] %v400
        %483 = vst [vmem:[%s270] sm:$0xff] %v469
        %484 = vst [vmem:[%s270 + $0x8] sm:$0xff] %v474
        %s485 = sand.u32 %s97, 1
        %s486 = scalar_lea.sflag [#allocation4], %s485
        %s487 = sand.u32 %s97, 1
        %s488 = smul.addr %s487, 16
        %s489 = scalar_lea.vmem [#allocation7], %s488
        %s490 = sand.u32 %s26, 1
        %s491 = scalar_lea.sflag [#allocation9], %s490
        %s492 = sand.u32 %s125, 1
        %s493 = smul.addr %s492, 16
        %s494 = scalar_lea.vmem [#allocation8], %s493
        %s495 = sand.u32 %s26, 1
        %s496 = scalar_lea.sflag [#allocation9], %s495
        %s497 = sand.u32 %s153, 1
        %s498 = smul.addr %s497, 16
        %s499 = scalar_lea.vmem [#allocation10], %s498
        // Predicated region
        $region37: #{tpu_custom_call.1} parent=27 // pred_check
          %p500 = pneg %p107
        $region38: #{tpu_custom_call.1} parent=27 // pred_check_branch
          %502 = sbr.rel (%p500) target = $region40
        $region39: #{tpu_custom_call.1} parent=27 // pred_region
          %s503 = smul.u32 2, %s31
          %s505 = ssub.s32 256, 256
          %506 = vsyncadd %s486, %s505
          %s507 = smul.addr %s30, 2
          %s508 = sadd.s32 %s503, %s507
          %s509 = smul.addr %s508, 128
          %s510 = scalar_lea.hbm %s2, %s509
          %s511 = sshll.u32 %s489, 4
          %s512 = int_to_ptr.vmem [resolvable:$true] %s511
          %517 = dma.vmem_to_hbm [thread:$0]  %s512, 256, %s510, %s486, 128, 128, 8
        $region40: #{tpu_custom_call.1} parent=27 // pred_fallthru
          _
        // Predicated region
        $region41: #{tpu_custom_call.1} parent=27 // pred_check
          %p518 = pneg %p135
        $region42: #{tpu_custom_call.1} parent=27 // pred_check_branch
          %520 = sbr.rel (%p518) target = $region44
        $region43: #{tpu_custom_call.1} parent=27 // pred_region
          %s521 = smul.u32 2, %s31
          %s523 = ssub.s32 256, 256
          %524 = vsyncadd %s491, %s523
          %s525 = smul.addr %s30, 2
          %s526 = sadd.s32 %s521, %s525
          %s527 = smul.addr %s526, 128
          %s528 = scalar_lea.hbm %s3, %s527
          %s529 = sshll.u32 %s494, 4
          %s530 = int_to_ptr.vmem [resolvable:$true] %s529
          %535 = dma.vmem_to_hbm [thread:$0]  %s530, 256, %s528, %s491, 128, 128, 8
        $region44: #{tpu_custom_call.1} parent=27 // pred_fallthru
          _
        // Predicated region
        $region45: #{tpu_custom_call.1} parent=27 // pred_check
          %p536 = pneg %p163
        $region46: #{tpu_custom_call.1} parent=27 // pred_check_branch
          %538 = sbr.rel (%p536) target = $region48
        $region47: #{tpu_custom_call.1} parent=27 // pred_region
          %s539 = smul.u32 2, %s31
          %s541 = ssub.s32 256, 256
          %542 = vsyncadd %s496, %s541
          %s543 = smul.addr %s30, 2
          %s544 = sadd.s32 %s539, %s543
          %s545 = smul.addr %s544, 128
          %s546 = scalar_lea.hbm %s4, %s545
          %s547 = sshll.u32 %s499, 4
          %s548 = int_to_ptr.vmem [resolvable:$true] %s547
          %553 = dma.vmem_to_hbm [thread:$0]  %s548, 256, %s546, %s496, 128, 128, 8
        $region48: #{tpu_custom_call.1} parent=27 // pred_fallthru
          _
      $region28: #{tpu_custom_call.1} parent=5 // pred_fallthru
        _
      %p554 = scmp.le.s32.totalorder 2, %s21
      // Predicated region
      $region49: #{tpu_custom_call.1} parent=5 // pred_check
        %p555 = pneg %p554
      $region50: #{tpu_custom_call.1} parent=5 // pred_check_branch
        %557 = sbr.rel (%p555) target = $region52
      $region51: #{tpu_custom_call.1} parent=5 // pred_region
        %s558 = ssub.s32 %s21, 2
        // Predicated region
        $region53: #{tpu_custom_call.1} parent=51 // pred_check
          %p559 = pneg %p113
        $region54: #{tpu_custom_call.1} parent=51 // pred_check_branch
          %561 = sbr.rel (%p559) target = $region56
        $region55: #{tpu_custom_call.1} parent=51 // pred_region
          %s562 = sand.u32 %s98, 1
          %s563 = scalar_lea.sflag [#allocation4], %s562
          %s564 = sand.u32 %s98, 1
          %s565 = smul.addr %s564, 16
          %s566 = scalar_lea.vmem [#allocation7], %s565
          %567 = dma.done %s563, 256
        $region56: #{tpu_custom_call.1} parent=51 // pred_fallthru
          _
        // Predicated region
        $region57: #{tpu_custom_call.1} parent=51 // pred_check
          %p568 = pneg %p141
        $region58: #{tpu_custom_call.1} parent=51 // pred_check_branch
          %570 = sbr.rel (%p568) target = $region60
        $region59: #{tpu_custom_call.1} parent=51 // pred_region
          %s571 = sand.u32 %s27, 1
          %s572 = scalar_lea.sflag [#allocation9], %s571
          %s573 = sand.u32 %s126, 1
          %s574 = smul.addr %s573, 16
          %s575 = scalar_lea.vmem [#allocation8], %s574
          %576 = dma.done %s572, 256
        $region60: #{tpu_custom_call.1} parent=51 // pred_fallthru
          _
        // Predicated region
        $region61: #{tpu_custom_call.1} parent=51 // pred_check
          %p577 = pneg %p169
        $region62: #{tpu_custom_call.1} parent=51 // pred_check_branch
          %579 = sbr.rel (%p577) target = $region64
        $region63: #{tpu_custom_call.1} parent=51 // pred_region
          %s580 = sand.u32 %s27, 1
          %s581 = scalar_lea.sflag [#allocation9], %s580
          %s582 = sand.u32 %s154, 1
          %s583 = smul.addr %s582, 16
          %s584 = scalar_lea.vmem [#allocation10], %s583
          %585 = dma.done %s581, 256
        $region64: #{tpu_custom_call.1} parent=51 // pred_fallthru
          _
      $region52: #{tpu_custom_call.1} parent=5 // pred_fallthru
        _
    $region6: #{tpu_custom_call.1} parent=1 // loop_footer
      %s25 = sadd.s32 1, %s21
    $region7: #{tpu_custom_call.1} parent=1 // loop_footer_branch
      %20 = sbr.rel target = $region3
    $region8: #{tpu_custom_call.1} parent=1 // loop_exit
      _
    %586 = vsyncpa [#allocation3], 1
    %s587 = scalar_lea.sflag [#allocation3], 1
    %588 = vsyncpa %s587, 1
    %589 = vsyncpa [#allocation6], 1
    %590 = vsyncpa [#allocation4], 1
    %s591 = scalar_lea.sflag [#allocation4], 1
    %592 = vsyncpa %s591, 1
    %593 = vsyncpa [#allocation9], 1
    %s594 = scalar_lea.sflag [#allocation9], 1
    %595 = vsyncpa %s594, 1

</llo_original>
